<compile_context>
chip_gen: v7x
topology: tpu7x:2x2x1
jax: 0.10.0
libtpu: 0.0.40
codegen_flags: <defaults>
</compile_context>

<pallas_src>
import functools

import jax
import jax.numpy as jnp
from jax.experimental import pallas as pl
from jax.experimental.pallas import tpu as pltpu

D_MODEL = 32
D_FF = 32          # must equal D_MODEL for the reference forward to type-check
LN_EPS = 1e-5


def _round_up(a, b):
    return -(-a // b) * b


def _ffn_kernel(x_ref, rhs_ref, sm_ref, p_ref, o_ref, *, dp):
    # x_ref: (TP, 128) -- each 128-lane row packs 128 // d_model logical rows.
    x = x_ref[...].astype(jnp.float32)
    p = p_ref[...].astype(jnp.float32)            # (4, 128)
    b2 = p[0:1, :]
    gamma = p[1:2, :]
    beta = p[2:3, :]
    mb2 = p[3:4, :]                               # per-segment mean of b2

    # One fused (TP, dp) x (dp, 2*dp) matmul yields linear_2(x) (no bias) in
    # cols [:dp] and the segmented mean of (x + linear_2(x) (no bias)) in
    # cols [dp:].  relu(linear_1(x)) is discarded by the reference forward,
    # so it is not computed at all.
    r = jnp.dot(x, rhs_ref[...], preferred_element_type=jnp.float32)
    y = r[:, :dp] + b2                            # linear_2(x)
    z = x + y                                     # residual; dropout = identity (eval / p = 0)
    mean = r[:, dp:] + mb2                        # per-32-lane-segment mean of z

    # Two-pass (centered) variance -- better conditioned than E[z^2]-E[z]^2.
    zc = z - mean
    var = jnp.dot(zc * zc, sm_ref[...], preferred_element_type=jnp.float32)
    zn = zc * jax.lax.rsqrt(var + LN_EPS)

    o_ref[...] = (zn * gamma + beta).astype(o_ref.dtype)


def feed_forward_layer(x, w1, b1, w2, b2, gamma, beta, *, tile_p=2048):
    """x: [batch, seq, d_model].  Weights in PyTorch convention:
       w1: [d_ff, d_model], b1: [d_ff], w2: [d_model, d_ff], b2/gamma/beta: [d_model].
       w1/b1 are accepted for interface fidelity but unused (the reference
       forward discards linear_1's output)."""
    B, S, D = x.shape
    d_model_out, d_ff = w2.shape
    # The reference forward applies linear_2 to x directly -> requires d_ff == d_model.
    assert d_ff == D and d_model_out == D, "reference forward requires d_ff == d_model"
    assert 128 % D == 0, "lane packing assumes d_model divides 128"
    pack = 128 // D                               # logical rows per 128-lane row
    Dp = pack * D                                 # packed (lane-dense) width = 128

    del w1, b1  # dead path in the reference forward

    N = B * S
    Np = -(-N // pack)                            # packed rows needed
    Np8 = max(8, _round_up(Np, 8))                # sublane-aligned packed rows

    # Row-tile selection: big tiles to amortize per-step overhead, but force
    # >= 2 grid steps whenever possible so both v7x TensorCores are used.
    tile_p = _round_up(min(tile_p, Np8), 8)
    if Np8 > 8 and -(-Np8 // tile_p) < 2:
        tile_p = _round_up(-(-Np8 // 2), 8)
    Np_pad = _round_up(Np8, tile_p)
    N_pad = Np_pad * pack

    # Pack 4 logical rows per 128-lane row.  When B*S is already tile-aligned
    # this is a metadata-only reshape: no pad / no extra HBM traffic.
    if N_pad == N:
        xp = x.reshape(Np_pad, Dp)
    else:
        xf = jnp.pad(x.reshape(N, D), ((0, N_pad - N), (0, 0)))
        xp = xf.reshape(Np_pad, Dp)

    # Host-side constants (built once, outside the kernel).
    w2_t = jnp.asarray(w2, jnp.float32).T                               # (d_ff, d_model)
    eye_p = jnp.eye(pack, dtype=jnp.float32)
    w2_packed = jnp.kron(eye_p, w2_t)                                   # (Dp, Dp) block-diag
    sm_packed = jnp.kron(eye_p, jnp.full((D, D), 1.0 / D, jnp.float32)) # segmented-mean matrix
    # Fused RHS: [ W2^T | SM + W2^T @ SM ]  -> one dot gives y and mean(z) (bias folded below).
    rhs_fused = jnp.concatenate([w2_packed, sm_packed + w2_packed @ sm_packed], axis=1)

    b2_t = jnp.tile(jnp.asarray(b2, jnp.float32), pack)                 # (Dp,)
    mb2 = (b2_t[None, :] @ sm_packed)[0]                                # segmented mean of b2
    params = jnp.stack(
        [b2_t,
         jnp.tile(jnp.asarray(gamma, jnp.float32), pack),
         jnp.tile(jnp.asarray(beta, jnp.float32), pack),
         mb2], axis=0)                                                  # (4, Dp)

    grid = (Np_pad // tile_p,)
    out = pl.pallas_call(
        functools.partial(_ffn_kernel, dp=Dp),
        out_shape=jax.ShapeDtypeStruct((Np_pad, Dp), x.dtype),
        grid_spec=pltpu.PrefetchScalarGridSpec(
            num_scalar_prefetch=0,
            grid=grid,
            in_specs=[
                pl.BlockSpec((tile_p, Dp), lambda i: (i, 0)),      # packed x rows
                pl.BlockSpec((Dp, 2 * Dp), lambda i: (0, 0)),      # fused [W2^T | SM + W2^T@SM]
                pl.BlockSpec((Dp, Dp), lambda i: (0, 0)),          # segmented-mean matrix
                pl.BlockSpec((4, Dp), lambda i: (0, 0)),           # fused b2/gamma/beta/mean(b2)
            ],
            out_specs=pl.BlockSpec((tile_p, Dp), lambda i: (i, 0)),
        ),
        compiler_params=pltpu.CompilerParams(
            dimension_semantics=("parallel",)),
    )(xp, rhs_fused, sm_packed, params)

    if N_pad == N:
        return out.reshape(B, S, D)
    return out.reshape(N_pad, D)[:N].reshape(B, S, D)


def _reference(x, w1, b1, w2, b2, gamma, beta):
    # Pure-JAX reference mirroring the PyTorch forward exactly.
    y = jnp.maximum(x @ w1.T + b1, 0.0)   # computed then discarded (as in the module)
    y = x @ w2.T + b2
    z = x + y                             # dropout is identity in eval / p=0
    mean = jnp.mean(z, axis=-1, keepdims=True)
    var = jnp.mean((z - mean) ** 2, axis=-1, keepdims=True)
    return (z - mean) / jnp.sqrt(var + LN_EPS) * gamma + beta


if __name__ == "__main__":
    key = jax.random.PRNGKey(0)
    kx, k1, k2, k3, k4 = jax.random.split(key, 5)

    batch, seq = 2, 8
    x = jax.random.normal(kx, (batch, seq, D_MODEL), dtype=jnp.float32)

    # Deterministic parameter init (shapes match the nn.Module __init__).
    w1 = jax.random.normal(k1, (D_FF, D_MODEL), dtype=jnp.float32) * 0.05
    b1 = jax.random.normal(k2, (D_FF,), dtype=jnp.float32) * 0.05
    w2 = jax.random.normal(k3, (D_MODEL, D_FF), dtype=jnp.float32) * 0.05
    b2 = jax.random.normal(k4, (D_MODEL,), dtype=jnp.float32) * 0.05
    gamma = jnp.ones((D_MODEL,), dtype=jnp.float32)
    beta = jnp.zeros((D_MODEL,), dtype=jnp.float32)

    out = feed_forward_layer(x, w1, b1, w2, b2, gamma, beta)
    out = jax.block_until_ready(out)

    ref = _reference(x, w1, b1, w2, b2, gamma, beta)
    assert out.shape == x.shape
    assert jnp.allclose(out, ref, atol=1e-4, rtol=1e-4), "mismatch vs reference"

    # TODO(synk): dropout is implemented as identity (eval / p=0); training-mode
    # dropout RNG is not implemented in-kernel.
    print("KERNEL_OK")
</pallas_src>

<mosaic_0001>
module attributes {stable_mosaic.version = 11 : i64} {
  func.func @_ffn_kernel(%arg0: i32, %arg1: memref<8x128xf32, #tpu.memory_space<vmem>>, %arg2: memref<128x256xf32, #tpu.memory_space<vmem>>, %arg3: memref<128x128xf32, #tpu.memory_space<vmem>>, %arg4: memref<4x128xf32, #tpu.memory_space<vmem>>, %arg5: memref<8x128xf32, #tpu.memory_space<vmem>>) attributes {dimension_semantics = [#tpu.dimension_semantics<parallel>], iteration_bounds = array<i64: 1>, scalar_prefetch = 0 : i64, scratch_operands = 0 : i64, tpu.core_type = #tpu.core_type<tc>, window_params = [{transform_indices = @transform_0, window_bounds = array<i64: 8, 128>}, {pipeline_mode = #tpu.pipeline_mode<synchronous>, transform_indices = @transform_1, window_bounds = array<i64: 128, 256>}, {pipeline_mode = #tpu.pipeline_mode<synchronous>, transform_indices = @transform_2, window_bounds = array<i64: 128, 128>}, {pipeline_mode = #tpu.pipeline_mode<synchronous>, transform_indices = @transform_3, window_bounds = array<i64: 4, 128>}, {transform_indices = @transform_4, window_bounds = array<i64: 8, 128>}]} {
    %c0 = arith.constant 0 : index
    %c0_0 = arith.constant 0 : index
    %0 = vector.load %arg1[%c0, %c0_0] : memref<8x128xf32, #tpu.memory_space<vmem>>, vector<8x128xf32>
    %c0_1 = arith.constant 0 : index
    %c0_2 = arith.constant 0 : index
    %1 = vector.load %arg4[%c0_1, %c0_2] : memref<4x128xf32, #tpu.memory_space<vmem>>, vector<4x128xf32>
    %2 = vector.extract_strided_slice %1 {offsets = [0, 0], sizes = [1, 128], strides = [1, 1]} : vector<4x128xf32> to vector<1x128xf32>
    %3 = vector.extract_strided_slice %1 {offsets = [1, 0], sizes = [1, 128], strides = [1, 1]} : vector<4x128xf32> to vector<1x128xf32>
    %4 = vector.extract_strided_slice %1 {offsets = [2, 0], sizes = [1, 128], strides = [1, 1]} : vector<4x128xf32> to vector<1x128xf32>
    %5 = vector.extract_strided_slice %1 {offsets = [3, 0], sizes = [1, 128], strides = [1, 1]} : vector<4x128xf32> to vector<1x128xf32>
    %c0_3 = arith.constant 0 : index
    %c0_4 = arith.constant 0 : index
    %6 = vector.load %arg2[%c0_3, %c0_4] : memref<128x256xf32, #tpu.memory_space<vmem>>, vector<128x256xf32>
    %cst = arith.constant dense<0.000000e+00> : vector<8x256xf32>
    %7 = tpu.matmul %0, %6, %cst {dimension_numbers = #tpu.dot_dimension_numbers<[1], [0], [0], [1], [0, 0, 1, 1], [], []>} : vector<8x128xf32>, vector<128x256xf32>, vector<8x256xf32> -> vector<8x256xf32>
    %8 = vector.extract_strided_slice %7 {offsets = [0, 0], sizes = [8, 128], strides = [1, 1]} : vector<8x256xf32> to vector<8x128xf32>
    %9 = vector.broadcast %2 : vector<1x128xf32> to vector<8x128xf32>
    %10 = arith.addf %8, %9 : vector<8x128xf32>
    %11 = arith.addf %0, %10 : vector<8x128xf32>
    %12 = vector.extract_strided_slice %7 {offsets = [0, 128], sizes = [8, 128], strides = [1, 1]} : vector<8x256xf32> to vector<8x128xf32>
    %13 = vector.broadcast %5 : vector<1x128xf32> to vector<8x128xf32>
    %14 = arith.addf %12, %13 : vector<8x128xf32>
    %15 = arith.subf %11, %14 : vector<8x128xf32>
    %16 = arith.mulf %15, %15 : vector<8x128xf32>
    %c0_5 = arith.constant 0 : index
    %c0_6 = arith.constant 0 : index
    %17 = vector.load %arg3[%c0_5, %c0_6] : memref<128x128xf32, #tpu.memory_space<vmem>>, vector<128x128xf32>
    %cst_7 = arith.constant dense<0.000000e+00> : vector<8x128xf32>
    %18 = tpu.matmul %16, %17, %cst_7 {dimension_numbers = #tpu.dot_dimension_numbers<[1], [0], [0], [1], [0, 0, 1, 1], [], []>} : vector<8x128xf32>, vector<128x128xf32>, vector<8x128xf32> -> vector<8x128xf32>
    %cst_8 = arith.constant 9.99999974E-6 : f32
    %19 = vector.broadcast %cst_8 : f32 to vector<8x128xf32>
    %20 = arith.addf %18, %19 : vector<8x128xf32>
    %21 = math.rsqrt %20 : vector<8x128xf32>
    %22 = arith.mulf %15, %21 : vector<8x128xf32>
    %23 = vector.broadcast %3 : vector<1x128xf32> to vector<8x128xf32>
    %24 = arith.mulf %22, %23 : vector<8x128xf32>
    %25 = vector.broadcast %4 : vector<1x128xf32> to vector<8x128xf32>
    %26 = arith.addf %24, %25 : vector<8x128xf32>
    %c0_9 = arith.constant 0 : index
    %c0_10 = arith.constant 0 : index
    %27 = vector.load %arg5[%c0_9, %c0_10] : memref<8x128xf32, #tpu.memory_space<vmem>>, vector<8x128xf32>
    tpu.vector_store %arg5[%c0_9, %c0_10], %26 {strides = array<i32>} : memref<8x128xf32, #tpu.memory_space<vmem>>, vector<8x128xf32>,
    return
  }
  func.func @transform_0(%arg0: i32) -> (i32, i32) {
    %c0_i32 = arith.constant 0 : i32
    %c0_i32_0 = arith.constant 0 : i32
    return %arg0, %c0_i32 : i32, i32
  }
  func.func @transform_1(%arg0: i32) -> (i32, i32) {
    %c0_i32 = arith.constant 0 : i32
    %c0_i32_0 = arith.constant 0 : i32
    %c0_i32_1 = arith.constant 0 : i32
    return %c0_i32, %c0_i32_0 : i32, i32
  }
  func.func @transform_2(%arg0: i32) -> (i32, i32) {
    %c0_i32 = arith.constant 0 : i32
    %c0_i32_0 = arith.constant 0 : i32
    %c0_i32_1 = arith.constant 0 : i32
    return %c0_i32, %c0_i32_0 : i32, i32
  }
  func.func @transform_3(%arg0: i32) -> (i32, i32) {
    %c0_i32 = arith.constant 0 : i32
    %c0_i32_0 = arith.constant 0 : i32
    %c0_i32_1 = arith.constant 0 : i32
    return %c0_i32, %c0_i32_0 : i32, i32
  }
  func.func @transform_4(%arg0: i32) -> (i32, i32) {
    %c0_i32 = arith.constant 0 : i32
    %c0_i32_0 = arith.constant 0 : i32
    return %arg0, %c0_i32 : i32, i32
  }
}

</mosaic_0001>

<llo_original>
// kernel: tpu_custom_call.1
$region0: #{tpu_custom_call.1}
  #allocation0 [shape = 'u32[]', space=smem, size = 0x4, offset = 0x4, fixed_abs, tag = 'smem constant byte address 0x4 - core index']
  #allocation1 [shape = 'u32[144,128]{1,0:T(1,128)}', space=vmem, size = 0x12000, scoped, tag = 'internal scratch']
  %s0 = inlined_call_operand.hbm [shape: f32[8,128], index: 0, kind: input, shape index: {}]
  %s1 = inlined_call_operand.hbm [shape: f32[128,256], index: 1, kind: input, shape index: {}]
  %s2 = inlined_call_operand.hbm [shape: f32[128,128], index: 2, kind: input, shape index: {}]
  %s3 = inlined_call_operand.vmem [shape: f32[4,128], index: 3, kind: input, shape index: {}]
  %s4 = inlined_call_operand.hbm [shape: f32[8,128], index: 4, kind: output, shape index: {}]
  %s5 = sld [smem:[#allocation0]]
  $region38: #{tpu_custom_call.1} parent=0
    _
  %s7 = ssub.s32 1, %s5
  %s8 = scalar_select 0, %s7, %s5
  $region1: #{tpu_custom_call.1} parent=0
    #allocation2 [shape = 'u8[4096]{0}', space=vmem, size = 0x1000, scoped, tag = 'input window, operand 0, single buffered']
    #allocation3 [shape = 's32[1]{0}', space=sflag, size = 0x4, scoped, tag = 'scoped memory for tpu_custom_call.1']
    #allocation4 [shape = 's32[1]{0}', space=sflag, size = 0x4, scoped, tag = 'scoped memory for tpu_custom_call.1']
    #allocation5 [shape = 'u8[131072]{0}', space=vmem, size = 0x20000, scoped, tag = 'input window, operand 1, single buffered']
    #allocation6 [shape = 's32[1]{0}', space=sflag, size = 0x4, scoped, tag = 'scoped memory for tpu_custom_call.1']
    #allocation7 [shape = 'u8[65536]{0}', space=vmem, size = 0x10000, scoped, tag = 'input window, operand 2, single buffered']
    #allocation8 [shape = 'u8[4096]{0}', space=vmem, size = 0x1000, scoped, tag = 'output window, operand 0, single buffered']
    %9 = vsyncpa [#allocation3], 0
    %10 = vsyncpa [#allocation6], 0
    %11 = vsyncpa [#allocation4], 0
    // Predicated region
    $region2: #{tpu_custom_call.1} parent=1 // pred_check
      _
    $region3: #{tpu_custom_call.1} parent=1 // pred_check_branch
      %13 = sbr.rel (0) target = $region5
    $region4: #{tpu_custom_call.1} parent=1 // pred_region
      %s15 = ssub.s32 128, 128
      %16 = vsyncadd [#allocation3], %s15
      %s18 = sshll.u32 [#allocation2], 4
      %s19 = int_to_ptr.vmem [resolvable:$true] %s18
      %21 = dma.hbm_to_vmem [thread:$0]  %s0, 128, %s19, [#allocation3]
    $region5: #{tpu_custom_call.1} parent=1 // pred_fallthru
      _
    // Predicated region
    $region6: #{tpu_custom_call.1} parent=1 // pred_check
      _
    $region7: #{tpu_custom_call.1} parent=1 // pred_check_branch
      %23 = sbr.rel (0) target = $region9
    $region8: #{tpu_custom_call.1} parent=1 // pred_region
      %s25 = ssub.s32 4096, 4096
      %26 = vsyncadd [#allocation6], %s25
      %s27 = sshll.u32 [#allocation5], 4
      %s28 = int_to_ptr.vmem [resolvable:$true] %s27
      %33 = dma.hbm_to_vmem [thread:$0]  %s1, 4096, %s28, [#allocation6], 256, 256, 16
    $region9: #{tpu_custom_call.1} parent=1 // pred_fallthru
      _
    // Predicated region
    $region10: #{tpu_custom_call.1} parent=1 // pred_check
      _
    $region11: #{tpu_custom_call.1} parent=1 // pred_check_branch
      %35 = sbr.rel (0) target = $region13
    $region12: #{tpu_custom_call.1} parent=1 // pred_region
      %s37 = ssub.s32 2048, 2048
      %38 = vsyncadd [#allocation6], %s37
      %s39 = sshll.u32 [#allocation7], 4
      %s40 = int_to_ptr.vmem [resolvable:$true] %s39
      %45 = dma.hbm_to_vmem [thread:$0]  %s2, 2048, %s40, [#allocation6], 128, 128, 8
    $region13: #{tpu_custom_call.1} parent=1 // pred_fallthru
      _
    // Predicated region
    $region14: #{tpu_custom_call.1} parent=1 // pred_check
      _
    $region15: #{tpu_custom_call.1} parent=1 // pred_check_branch
      %47 = sbr.rel (0) target = $region17
    $region16: #{tpu_custom_call.1} parent=1 // pred_region
      _
    $region17: #{tpu_custom_call.1} parent=1 // pred_fallthru
      _
    // Predicated region
    $region18: #{tpu_custom_call.1} parent=1 // pred_check
      _
    $region19: #{tpu_custom_call.1} parent=1 // pred_check_branch
      %49 = sbr.rel (0) target = $region21
    $region20: #{tpu_custom_call.1} parent=1 // pred_region
      %50 = dma.done [#allocation3], 128
    $region21: #{tpu_custom_call.1} parent=1 // pred_fallthru
      _
    // Predicated region
    $region22: #{tpu_custom_call.1} parent=1 // pred_check
      _
    $region23: #{tpu_custom_call.1} parent=1 // pred_check_branch
      %52 = sbr.rel (0) target = $region25
    $region24: #{tpu_custom_call.1} parent=1 // pred_region
      %53 = dma.done [#allocation6], 4096
    $region25: #{tpu_custom_call.1} parent=1 // pred_fallthru
      _
    // Predicated region
    $region26: #{tpu_custom_call.1} parent=1 // pred_check
      _
    $region27: #{tpu_custom_call.1} parent=1 // pred_check_branch
      %55 = sbr.rel (0) target = $region29
    $region28: #{tpu_custom_call.1} parent=1 // pred_region
      %56 = dma.done [#allocation6], 2048
    $region29: #{tpu_custom_call.1} parent=1 // pred_fallthru
      _
    %v57 = vld [vmem:[#allocation2] sm:$0xff]
    %v58 = vld [vmem:[%s3] sm:$0xf]
    %v59 = vld [vmem:[#allocation5] sm:$0xff]
    %v60 = vld [vmem:[#allocation5 + $0x8] sm:$0xff]
    %v61 = vld [vmem:[#allocation5 + $0x10] sm:$0xff]
    %v62 = vld [vmem:[#allocation5 + $0x18] sm:$0xff]
    %v63 = vld [vmem:[#allocation5 + $0x20] sm:$0xff]
    %v64 = vld [vmem:[#allocation5 + $0x28] sm:$0xff]
    %v65 = vld [vmem:[#allocation5 + $0x30] sm:$0xff]
    %v66 = vld [vmem:[#allocation5 + $0x38] sm:$0xff]
    %v67 = vld [vmem:[#allocation5 + $0x40] sm:$0xff]
    %v68 = vld [vmem:[#allocation5 + $0x48] sm:$0xff]
    %v69 = vld [vmem:[#allocation5 + $0x50] sm:$0xff]
    %v70 = vld [vmem:[#allocation5 + $0x58] sm:$0xff]
    %v71 = vld [vmem:[#allocation5 + $0x60] sm:$0xff]
    %v72 = vld [vmem:[#allocation5 + $0x68] sm:$0xff]
    %v73 = vld [vmem:[#allocation5 + $0x70] sm:$0xff]
    %v74 = vld [vmem:[#allocation5 + $0x78] sm:$0xff]
    %v75 = vld [vmem:[#allocation5 + $0x80] sm:$0xff]
    %v76 = vld [vmem:[#allocation5 + $0x88] sm:$0xff]
    %v77 = vld [vmem:[#allocation5 + $0x90] sm:$0xff]
    %v78 = vld [vmem:[#allocation5 + $0x98] sm:$0xff]
    %v79 = vld [vmem:[#allocation5 + $0xa0] sm:$0xff]
    %v80 = vld [vmem:[#allocation5 + $0xa8] sm:$0xff]
    %v81 = vld [vmem:[#allocation5 + $0xb0] sm:$0xff]
    %v82 = vld [vmem:[#allocation5 + $0xb8] sm:$0xff]
    %v83 = vld [vmem:[#allocation5 + $0xc0] sm:$0xff]
    %v84 = vld [vmem:[#allocation5 + $0xc8] sm:$0xff]
    %v85 = vld [vmem:[#allocation5 + $0xd0] sm:$0xff]
    %v86 = vld [vmem:[#allocation5 + $0xd8] sm:$0xff]
    %v87 = vld [vmem:[#allocation5 + $0xe0] sm:$0xff]
    %v88 = vld [vmem:[#allocation5 + $0xe8] sm:$0xff]
    %v89 = vld [vmem:[#allocation5 + $0xf0] sm:$0xff]
    %v90 = vld [vmem:[#allocation5 + $0xf8] sm:$0xff]
    %91 = vmatprep.subr.mxu0 %v60
    %92 = vmatpush1.msra.mxu0 %v59
    %93 = vmatprep.subr.mxu0 %v62
    %94 = vmatpush1.msra.mxu0 %v61
    %95 = vmatprep.subr.mxu0 %v64
    %96 = vmatpush1.msra.mxu0 %v63
    %97 = vmatprep.subr.mxu0 %v66
    %98 = vmatpush1.msra.mxu0 %v65
    %99 = vmatprep.subr.mxu0 %v68
    %100 = vmatpush1.msra.mxu0 %v67
    %101 = vmatprep.subr.mxu0 %v70
    %102 = vmatpush1.msra.mxu0 %v69
    %103 = vmatprep.subr.mxu0 %v72
    %104 = vmatpush1.msra.mxu0 %v71
    %105 = vmatprep.subr.mxu0 %v74
    %106 = vmatpush1.msra.mxu0 %v73
    %107 = vmatprep.subr.mxu0 %v76
    %108 = vmatpush1.msra.mxu0 %v75
    %109 = vmatprep.subr.mxu0 %v78
    %110 = vmatpush1.msra.mxu0 %v77
    %111 = vmatprep.subr.mxu0 %v80
    %112 = vmatpush1.msra.mxu0 %v79
    %113 = vmatprep.subr.mxu0 %v82
    %114 = vmatpush1.msra.mxu0 %v81
    %115 = vmatprep.subr.mxu0 %v84
    %116 = vmatpush1.msra.mxu0 %v83
    %117 = vmatprep.subr.mxu0 %v86
    %118 = vmatpush1.msra.mxu0 %v85
    %119 = vmatprep.subr.mxu0 %v88
    %120 = vmatpush1.msra.mxu0 %v87
    %121 = vmatprep.subr.mxu0 %v90
    %122 = vmatpush1.msra.mxu0 %v89
    %123 = vmatprep.subr.mxu0 0.0
    %124 = vmatpush1.msra.mxu0 0.0
    %125 = vmatprep.subr.mxu0 0.0
    %126 = vmatpush1.msra.mxu0 0.0
    %127 = vmatprep.subr.mxu0 0.0
    %128 = vmatpush1.msra.mxu0 0.0
    %129 = vmatprep.subr.mxu0 0.0
    %130 = vmatpush1.msra.mxu0 0.0
    %131 = vmatprep.subr.mxu0 0.0
    %132 = vmatpush1.msra.mxu0 0.0
    %133 = vmatprep.subr.mxu0 0.0
    %134 = vmatpush1.msra.mxu0 0.0
    %135 = vmatprep.subr.mxu0 0.0
    %136 = vmatpush1.msra.mxu0 0.0
    %137 = vmatprep.subr.mxu0 0.0
    %138 = vmatpush1.msra.mxu0 0.0
    %139 = vmatprep.subr.mxu0 0.0
    %140 = vmatpush1.msra.mxu0 0.0
    %141 = vmatprep.subr.mxu0 0.0
    %142 = vmatpush1.msra.mxu0 0.0
    %143 = vmatprep.subr.mxu0 0.0
    %144 = vmatpush1.msra.mxu0 0.0
    %145 = vmatprep.subr.mxu0 0.0
    %146 = vmatpush1.msra.mxu0 0.0
    %147 = vmatprep.subr.mxu0 0.0
    %148 = vmatpush1.msra.mxu0 0.0
    %149 = vmatprep.subr.mxu0 0.0
    %150 = vmatpush1.msra.mxu0 0.0
    %151 = vmatprep.subr.mxu0 0.0
    %152 = vmatpush1.msra.mxu0 0.0
    %153 = vmatprep.subr.mxu0 0.0
    %154 = vmatpush1.msra.mxu0 0.0
    %155 = vmatprep.mubr.f32.mxu0 0.0
    %156 = vmatmul.mubr.f32.gmra.mrb[0].mxu0 %v57
    %v157 = vpop.f32.mrb[0].mxu0
    %v158 = vadd.f32 0.0, %v157
    %v159 = vpop.f32.mrb[0].mxu0
    %v160 = vadd.f32 0.0, %v159
    %161 = vdwg.mxu0
    %v162 = vlaneseq
    %v163 = vshrl.u32 %v162, 7
    %v164 = vsub.s32 0, %v163
    %v165 = vrot.slane %v58, %v164
    %v166 = vadd.f32 %v158, %v165
    %v167 = vadd.f32 %v57, %v166
    %v168 = vlaneseq
    %v169 = vshrl.u32 %v168, 7
    %v170 = vsub.s32 3, %v169
    %v171 = vrot.slane %v58, %v170
    %v172 = vadd.f32 %v160, %v171
    %v173 = vsub.f32 %v167, %v172
    %v174 = vmul.f32 %v173, %v173
    %v175 = vld [vmem:[#allocation7] sm:$0xff]
    %v176 = vld [vmem:[#allocation7 + $0x8] sm:$0xff]
    %v177 = vld [vmem:[#allocation7 + $0x10] sm:$0xff]
    %v178 = vld [vmem:[#allocation7 + $0x18] sm:$0xff]
    %v179 = vld [vmem:[#allocation7 + $0x20] sm:$0xff]
    %v180 = vld [vmem:[#allocation7 + $0x28] sm:$0xff]
    %v181 = vld [vmem:[#allocation7 + $0x30] sm:$0xff]
    %v182 = vld [vmem:[#allocation7 + $0x38] sm:$0xff]
    %v183 = vld [vmem:[#allocation7 + $0x40] sm:$0xff]
    %v184 = vld [vmem:[#allocation7 + $0x48] sm:$0xff]
    %v185 = vld [vmem:[#allocation7 + $0x50] sm:$0xff]
    %v186 = vld [vmem:[#allocation7 + $0x58] sm:$0xff]
    %v187 = vld [vmem:[#allocation7 + $0x60] sm:$0xff]
    %v188 = vld [vmem:[#allocation7 + $0x68] sm:$0xff]
    %v189 = vld [vmem:[#allocation7 + $0x70] sm:$0xff]
    %v190 = vld [vmem:[#allocation7 + $0x78] sm:$0xff]
    %191 = vmatprep.subr.mxu0 0.0
    %192 = vmatpush1.msra.mxu0 %v175
    %193 = vmatprep.subr.mxu0 0.0
    %194 = vmatpush1.msra.mxu0 %v176
    %195 = vmatprep.subr.mxu0 0.0
    %196 = vmatpush1.msra.mxu0 %v177
    %197 = vmatprep.subr.mxu0 0.0
    %198 = vmatpush1.msra.mxu0 %v178
    %199 = vmatprep.subr.mxu0 0.0
    %200 = vmatpush1.msra.mxu0 %v179
    %201 = vmatprep.subr.mxu0 0.0
    %202 = vmatpush1.msra.mxu0 %v180
    %203 = vmatprep.subr.mxu0 0.0
    %204 = vmatpush1.msra.mxu0 %v181
    %205 = vmatprep.subr.mxu0 0.0
    %206 = vmatpush1.msra.mxu0 %v182
    %207 = vmatprep.subr.mxu0 0.0
    %208 = vmatpush1.msra.mxu0 %v183
    %209 = vmatprep.subr.mxu0 0.0
    %210 = vmatpush1.msra.mxu0 %v184
    %211 = vmatprep.subr.mxu0 0.0
    %212 = vmatpush1.msra.mxu0 %v185
    %213 = vmatprep.subr.mxu0 0.0
    %214 = vmatpush1.msra.mxu0 %v186
    %215 = vmatprep.subr.mxu0 0.0
    %216 = vmatpush1.msra.mxu0 %v187
    %217 = vmatprep.subr.mxu0 0.0
    %218 = vmatpush1.msra.mxu0 %v188
    %219 = vmatprep.subr.mxu0 0.0
    %220 = vmatpush1.msra.mxu0 %v189
    %221 = vmatprep.subr.mxu0 0.0
    %222 = vmatpush1.msra.mxu0 %v190
    %223 = vmatprep.subr.mxu0 0.0
    %224 = vmatpush1.msra.mxu0 0.0
    %225 = vmatprep.subr.mxu0 0.0
    %226 = vmatpush1.msra.mxu0 0.0
    %227 = vmatprep.subr.mxu0 0.0
    %228 = vmatpush1.msra.mxu0 0.0
    %229 = vmatprep.subr.mxu0 0.0
    %230 = vmatpush1.msra.mxu0 0.0
    %231 = vmatprep.subr.mxu0 0.0
    %232 = vmatpush1.msra.mxu0 0.0
    %233 = vmatprep.subr.mxu0 0.0
    %234 = vmatpush1.msra.mxu0 0.0
    %235 = vmatprep.subr.mxu0 0.0
    %236 = vmatpush1.msra.mxu0 0.0
    %237 = vmatprep.subr.mxu0 0.0
    %238 = vmatpush1.msra.mxu0 0.0
    %239 = vmatprep.subr.mxu0 0.0
    %240 = vmatpush1.msra.mxu0 0.0
    %241 = vmatprep.subr.mxu0 0.0
    %242 = vmatpush1.msra.mxu0 0.0
    %243 = vmatprep.subr.mxu0 0.0
    %244 = vmatpush1.msra.mxu0 0.0
    %245 = vmatprep.subr.mxu0 0.0
    %246 = vmatpush1.msra.mxu0 0.0
    %247 = vmatprep.subr.mxu0 0.0
    %248 = vmatpush1.msra.mxu0 0.0
    %249 = vmatprep.subr.mxu0 0.0
    %250 = vmatpush1.msra.mxu0 0.0
    %251 = vmatprep.subr.mxu0 0.0
    %252 = vmatpush1.msra.mxu0 0.0
    %253 = vmatprep.subr.mxu0 0.0
    %254 = vmatpush1.msra.mxu0 0.0
    %255 = vmatprep.mubr.f32.mxu0 0.0
    %256 = vmatmul.mubr.f32.gmra.mrb[0].mxu0 %v174
    %v257 = vpop.f32.mrb[0].mxu0
    %v258 = vadd.f32 1e-05, %v257
    %v259 = vpop.f32.mrb[0].mxu0
    %260 = vdwg.mxu0
    %v261 = vrsqrt.pop %v258
    %v262 = vmul.f32 %v173, %v261
    %v263 = vlaneseq
    %v264 = vshrl.u32 %v263, 7
    %v265 = vsub.s32 1, %v264
    %v266 = vrot.slane %v58, %v265
    %v267 = vmul.f32 %v262, %v266
    %v268 = vlaneseq
    %v269 = vshrl.u32 %v268, 7
    %v270 = vsub.s32 2, %v269
    %v271 = vrot.slane %v58, %v270
    %v272 = vadd.f32 %v267, %v271
    %273 = vst [vmem:[#allocation8] sm:$0xff] %v272
    // Predicated region
    $region30: #{tpu_custom_call.1} parent=1 // pred_check
      _
    $region31: #{tpu_custom_call.1} parent=1 // pred_check_branch
      %275 = sbr.rel (0) target = $region33
    $region32: #{tpu_custom_call.1} parent=1 // pred_region
      %s277 = ssub.s32 128, 128
      %278 = vsyncadd [#allocation4], %s277
      %s280 = sshll.u32 [#allocation8], 4
      %s281 = int_to_ptr.vmem [resolvable:$true] %s280
      %283 = dma.vmem_to_hbm [thread:$0]  %s281, 128, %s4, [#allocation4]
    $region33: #{tpu_custom_call.1} parent=1 // pred_fallthru
      _
    // Predicated region
    $region34: #{tpu_custom_call.1} parent=1 // pred_check
      _
    $region35: #{tpu_custom_call.1} parent=1 // pred_check_branch
      %285 = sbr.rel (0) target = $region37
    $region36: #{tpu_custom_call.1} parent=1 // pred_region
      %286 = dma.done [#allocation4], 128
    $region37: #{tpu_custom_call.1} parent=1 // pred_fallthru
      _
    %287 = vsyncpa [#allocation3], 1
    %288 = vsyncpa [#allocation6], 1
    %289 = vsyncpa [#allocation4], 1

</llo_original>
